<compile_context>
chip_gen: v5e
topology: v5e:2x2
jax: 0.10.0
libtpu: 0.0.40
codegen_flags: <defaults>
</compile_context>

<pallas_src>
import functools

import jax
import jax.numpy as jnp
from jax import lax
from jax.experimental import pallas as pl
from jax.experimental.pallas import tpu as pltpu


# ----------------------------------------------------------------- utilities
def _rup(x, m):
    return ((x + m - 1) // m) * m


def _pick_tm(M):
    if M >= 512:
        return 256
    if M >= 128:
        return 128
    return _rup(M, 16)          # single M tile, bf16-sublane aligned


def _pick_tn(N):
    return 256 if N % 256 == 0 else N


# ------------------------------------ Pallas kernel: matmul + BN + act (+res)
def _mm_kernel(a_ref, b_ref, s_ref, c_ref, *rest, act, pre_act, has_res):
    if has_res:
        res_ref, o_ref = rest
    else:
        (o_ref,) = rest

    a = a_ref[...]
    if pre_act == "leaky":                       # LeakyReLU fused on the input
        a = jnp.where(a > 0, a, 0.1 * a)

    # bf16 MXU matmul, f32 accumulation.
    y = jnp.dot(a.astype(jnp.bfloat16), b_ref[...].astype(jnp.bfloat16),
                preferred_element_type=jnp.float32)

    # f32 epilogue: folded BatchNorm, optional residual, activation.
    y = y * s_ref[...] + c_ref[...]
    if has_res:
        y = y + res_ref[...].astype(jnp.float32)
    if act == "relu":
        y = jnp.maximum(y, 0.0)
    elif act == "leaky":
        y = jnp.where(y > 0.0, y, 0.1 * y)
    o_ref[...] = y.astype(o_ref.dtype)


def matmul_bn_act(a, b, scale, bias, act="none", residual=None,
                  pre_act="none", out_dtype=jnp.bfloat16):
    """act((maybe pre_act(a)) @ b * scale + bias [+ residual]).

    a:[M,K] (f32 or bf16), b:[K,N] bf16, scale/bias:[N] f32, residual:[M,N].
    K and N must already be tile-friendly (handled by callers / init-time pads).
    """
    M, K = a.shape
    K2, N = b.shape
    assert K == K2
    tm = _pick_tm(M)
    tn = _pick_tn(N)
    Mp = _rup(M, tm)
    if Mp != M:                                   # only tiny deep-layer / fc cases
        a = jnp.pad(a, ((0, Mp - M), (0, 0)))
        if residual is not None:
            residual = jnp.pad(residual, ((0, Mp - M), (0, 0)))

    s2 = scale.astype(jnp.float32).reshape(1, N)
    c2 = bias.astype(jnp.float32).reshape(1, N)

    in_specs = [
        pl.BlockSpec((tm, K), lambda i, j: (i, 0)),    # full-K A block
        pl.BlockSpec((K, tn), lambda i, j: (0, j)),    # full-K B block
        pl.BlockSpec((1, tn), lambda i, j: (0, j)),
        pl.BlockSpec((1, tn), lambda i, j: (0, j)),
    ]
    args = [a, b, s2, c2]
    if residual is not None:
        in_specs.append(pl.BlockSpec((tm, tn), lambda i, j: (i, j)))
        args.append(residual)

    out = pl.pallas_call(
        functools.partial(_mm_kernel, act=act, pre_act=pre_act,
                          has_res=residual is not None),
        out_shape=jax.ShapeDtypeStruct((Mp, N), out_dtype),
        grid=(Mp // tm, N // tn),
        in_specs=in_specs,
        out_specs=pl.BlockSpec((tm, tn), lambda i, j: (i, j)),
        compiler_params=pltpu.CompilerParams(
            dimension_semantics=("parallel", "parallel")),
    )(*args)
    if Mp != M:
        out = out[:M]
    return out


# --------------------------------------- Pallas kernel: fused 3x3/s2 max pool
def _max9_kernel(*refs):
    o_ref = refs[-1]
    m = refs[0][...]
    for r in refs[1:-1]:
        m = jnp.maximum(m, r[...])
    o_ref[...] = m


def _window_slices(x, kh, kw, stride, pad, pad_value=0.0):
    N, H, W, C = x.shape
    if pad > 0:
        x = jnp.pad(x, ((0, 0), (pad, pad), (pad, pad), (0, 0)),
                    constant_values=pad_value)
    Hp, Wp = H + 2 * pad, W + 2 * pad
    Ho = (Hp - kh) // stride + 1
    Wo = (Wp - kw) // stride + 1
    slices = []
    for i in range(kh):
        for j in range(kw):
            sl = lax.slice(x, (0, i, j, 0),
                           (N, i + (Ho - 1) * stride + 1,
                            j + (Wo - 1) * stride + 1, C),
                           (1, stride, stride, 1))
            slices.append(sl)          # [N, Ho, Wo, C]
    return slices, Ho, Wo


def maxpool_3x3_s2(x):
    """MaxPool2d(kernel=3, stride=2, padding=1) on NHWC, lane-dense layout."""
    N, H, W, C = x.shape
    neg = float(jnp.finfo(x.dtype).min)
    slices, Ho, Wo = _window_slices(x, 3, 3, 2, 1, pad_value=neg)

    T = N * Ho * Wo * C
    LANES, TR = 128, 128
    Tp = _rup(T, LANES * TR)
    flats = []
    for s in slices:
        f = s.reshape(-1)
        if Tp != T:
            f = jnp.pad(f, (0, Tp - T), constant_values=neg)
        flats.append(f.reshape(Tp // LANES, LANES))
    rows = Tp // LANES

    out = pl.pallas_call(
        _max9_kernel,
        out_shape=jax.ShapeDtypeStruct((rows, LANES), x.dtype),
        grid=(rows // TR,),
        in_specs=[pl.BlockSpec((TR, LANES), lambda i: (i, 0)) for _ in flats],
        out_specs=pl.BlockSpec((TR, LANES), lambda i: (i, 0)),
        compiler_params=pltpu.CompilerParams(dimension_semantics=("parallel",)),
    )(*flats)
    return out.reshape(-1)[:T].reshape(N, Ho, Wo, C)


# ------------------------------------- Pallas kernel: global average pooling
def _avgpool_kernel(x_ref, o_ref):
    o_ref[...] = jnp.mean(x_ref[...].astype(jnp.float32), axis=1)


def global_avgpool(x):
    """AdaptiveAvgPool2d((1,1)) + squeeze -> [N, C] (f32)."""
    N, H, W, C = x.shape
    HW = H * W
    xr = x.reshape(N, HW, C)
    Ct = 256 if C % 256 == 0 else C
    return pl.pallas_call(
        _avgpool_kernel,
        out_shape=jax.ShapeDtypeStruct((N, C), jnp.float32),
        grid=(C // Ct,),
        in_specs=[pl.BlockSpec((N, HW, Ct), lambda j: (0, 0, j))],
        out_specs=pl.BlockSpec((N, Ct), lambda j: (0, j)),
        compiler_params=pltpu.CompilerParams(dimension_semantics=("parallel",)),
    )(xr)


# ----------------------------------------------------------------- conv glue
def conv_bn_act(x, cp, act="none", residual=None):
    """Conv2d(bias=False) -> BatchNorm2d(eval) -> act, optional fused residual.

    cp["w"] is the weight pre-reshaped to [K_padded, Cout] bf16 at init.
    """
    kh, kw, cin, cout = cp["kh"], cp["kw"], cp["cin"], cp["cout"]
    stride, pad = cp["stride"], cp["pad"]
    N = x.shape[0]

    if kh == 1 and kw == 1:
        if stride > 1:
            x = x[:, ::stride, ::stride, :]
        Ho, Wo = x.shape[1], x.shape[2]
        a = x.reshape(N * Ho * Wo, cin)                      # no im2col
    else:
        slices, Ho, Wo = _window_slices(x, kh, kw, stride, pad)
        patches = jnp.stack(slices, axis=3)                  # [N,Ho,Wo,kh*kw,Cin] bf16
        a = patches.reshape(N * Ho * Wo, kh * kw * cin)

    K = kh * kw * cin
    Kp = cp["w"].shape[0]
    if Kp != K:                                              # only conv1 / layer1
        a = jnp.pad(a, ((0, 0), (0, Kp - K)))

    bn = cp["bn"]
    scale = bn["gamma"] * lax.rsqrt(bn["var"] + 1e-5)
    bias = bn["beta"] - bn["mean"] * scale
    y = matmul_bn_act(a, cp["w"], scale, bias, act=act, residual=residual)
    return y.reshape(N, Ho, Wo, cout)


# --------------------------------------------------------------- model forward
def bottleneck(x, p):
    out = conv_bn_act(x, p["conv1"], act="relu")
    out = conv_bn_act(out, p["conv2"], act="relu")
    if "down" in p:
        ident = conv_bn_act(x, p["down"], act="none")
    else:
        ident = x
    Nb, Ho, Wo, C4 = ident.shape
    identity = ident.reshape(Nb * Ho * Wo, C4)
    # conv3 (1x1) with residual add + ReLU fused in the matmul epilogue.
    return conv_bn_act(out, p["conv3"], act="relu", residual=identity)


def classblock_feature(x, p):
    # add_block: Linear(2048,512) + BatchNorm1d(512) -> f  (pre-LeakyReLU)
    bn = p["bn"]
    scale = bn["gamma"] * lax.rsqrt(bn["var"] + 1e-5)
    bias = bn["beta"] + scale * (p["fc1_b"] - bn["mean"])
    f = matmul_bn_act(x, p["fc1_w"], scale, bias, act="none",
                      out_dtype=jnp.float32)
    # add_block2 (LeakyReLU + eval-mode Dropout) fused as fc2 pre-activation.
    ones = jnp.ones((p["fc2_w"].shape[1],), jnp.float32)
    logits = matmul_bn_act(f, p["fc2_w"], ones, p["fc2_b"], act="none",
                           pre_act="leaky", out_dtype=jnp.float32)
    return f, logits[:, :p["class_num"]]


def ft_net_direct_forward(params, x_nchw):
    x = jnp.transpose(x_nchw, (0, 2, 3, 1)).astype(jnp.bfloat16)  # NCHW -> NHWC
    x = conv_bn_act(x, params["conv1"], act="relu")
    x = maxpool_3x3_s2(x)
    for layer in params["layers"]:
        for blk in layer:
            x = bottleneck(x, blk)
    pooled = global_avgpool(x)                                    # [N, 2048] f32
    return classblock_feature(pooled, params["classifier"])


# -------------------------------------------------------- deterministic params
def _bn_init(c):
    return {"gamma": jnp.ones((c,), jnp.float32),
            "beta": jnp.zeros((c,), jnp.float32),
            "mean": jnp.zeros((c,), jnp.float32),
            "var": jnp.ones((c,), jnp.float32)}


def _conv_init(key, kh, kw, cin, cout, stride, pad):
    std = (2.0 / (kh * kw * cin)) ** 0.5           # kaiming fan_in, relu
    w = std * jax.random.normal(key, (kh, kw, cin, cout), jnp.float32)
    K = kh * kw * cin
    Kp = _rup(K, 128)                              # pre-align K once at init
    w2 = w.reshape(K, cout)
    if Kp != K:
        w2 = jnp.pad(w2, ((0, Kp - K), (0, 0)))
    return {"w": w2.astype(jnp.bfloat16), "kh": kh, "kw": kw, "cin": cin,
            "cout": cout, "stride": stride, "pad": pad, "bn": _bn_init(cout)}


def init_resnet50(key):
    keys = iter(jax.random.split(key, 64))
    params = {"conv1": _conv_init(next(keys), 7, 7, 3, 64, 2, 3)}
    layers = []
    inplanes = 64
    for planes, nblocks, stride in [(64, 3, 1), (128, 4, 2),
                                    (256, 6, 2), (512, 3, 2)]:
        blocks = []
        for b in range(nblocks):
            s = stride if b == 0 else 1
            blk = {
                "conv1": _conv_init(next(keys), 1, 1, inplanes, planes, 1, 0),
                "conv2": _conv_init(next(keys), 3, 3, planes, planes, s, 1),
                "conv3": _conv_init(next(keys), 1, 1, planes, planes * 4, 1, 0),
            }
            if b == 0:   # downsample branch (channel and/or stride mismatch)
                blk["down"] = _conv_init(next(keys), 1, 1, inplanes,
                                         planes * 4, s, 0)
            blocks.append(blk)
            inplanes = planes * 4
        layers.append(blocks)
    params["layers"] = layers
    return params


def init_classblock(key, class_num, input_dim=2048, bottleneck_dim=512):
    k1, k2, k3 = jax.random.split(key, 3)
    ncp = _rup(class_num, 128)                     # pad classifier width once
    fc2_w = 0.001 * jax.random.normal(k3, (bottleneck_dim, class_num), jnp.float32)
    fc2_w = jnp.pad(fc2_w, ((0, 0), (0, ncp - class_num))).astype(jnp.bfloat16)
    return {
        "fc1_w": ((2.0 / bottleneck_dim) ** 0.5
                  * jax.random.normal(k1, (input_dim, bottleneck_dim),
                                      jnp.float32)).astype(jnp.bfloat16),
        "fc1_b": jnp.zeros((bottleneck_dim,), jnp.float32),
        "bn": {"gamma": 1.0 + 0.02 * jax.random.normal(k2, (bottleneck_dim,),
                                                       jnp.float32),
               "beta": jnp.zeros((bottleneck_dim,), jnp.float32),
               "mean": jnp.zeros((bottleneck_dim,), jnp.float32),
               "var": jnp.ones((bottleneck_dim,), jnp.float32)},
        "fc2_w": fc2_w,
        "fc2_b": jnp.zeros((ncp,), jnp.float32),
        "class_num": class_num,
    }


# ------------------------------------------------------------------------ main
if __name__ == "__main__":
    root = jax.random.PRNGKey(0)
    k_backbone, k_cls, k_x = jax.random.split(root, 3)

    class_num = 10
    params = init_resnet50(k_backbone)
    params["classifier"] = init_classblock(k_cls, class_num)

    # small input (PyTorch NCHW): batch=2, 3 channels, 64x64 spatial
    x = jax.random.normal(k_x, (2, 3, 64, 64), jnp.float32)

    f, logits = ft_net_direct_forward(params, x)
    jax.block_until_ready((f, logits))

    assert f.shape == (2, 512), f.shape
    assert logits.shape == (2, class_num), logits.shape
    assert bool(jnp.isfinite(f).all()) and bool(jnp.isfinite(logits).all())
    print("KERNEL_OK")
</pallas_src>

<mosaic_0001>
module attributes {stable_mosaic.version = 11 : i64} {
  func.func @_mm_kernel(%arg0: i32, %arg1: i32, %arg2: memref<256x256xbf16, #tpu.memory_space<vmem>>, %arg3: memref<256x64xbf16, #tpu.memory_space<vmem>>, %arg4: memref<1x64xf32, #tpu.memory_space<vmem>>, %arg5: memref<1x64xf32, #tpu.memory_space<vmem>>, %arg6: memref<256x64xbf16, #tpu.memory_space<vmem>>) attributes {dimension_semantics = [#tpu.dimension_semantics<parallel>, #tpu.dimension_semantics<parallel>], iteration_bounds = array<i64: 8, 1>, scalar_prefetch = 0 : i64, scratch_operands = 0 : i64, tpu.core_type = #tpu.core_type<tc>, window_params = [{transform_indices = @transform_0, window_bounds = array<i64: 256, 256>}, {transform_indices = @transform_1, window_bounds = array<i64: 256, 64>}, {transform_indices = @transform_2, window_bounds = array<i64: 1, 64>}, {transform_indices = @transform_3, window_bounds = array<i64: 1, 64>}, {transform_indices = @transform_4, window_bounds = array<i64: 256, 64>}]} {
    %c0 = arith.constant 0 : index
    %c0_0 = arith.constant 0 : index
    %0 = vector.load %arg2[%c0, %c0_0] : memref<256x256xbf16, #tpu.memory_space<vmem>>, vector<256x256xbf16>
    %c0_1 = arith.constant 0 : index
    %c0_2 = arith.constant 0 : index
    %1 = vector.load %arg3[%c0_1, %c0_2] : memref<256x64xbf16, #tpu.memory_space<vmem>>, vector<256x64xbf16>
    %cst = arith.constant dense<0.000000e+00> : vector<256x64xf32>
    %2 = tpu.matmul %0, %1, %cst {dimension_numbers = #tpu.dot_dimension_numbers<[1], [0], [0], [1], [0, 0, 1, 1], [], []>} : vector<256x256xbf16>, vector<256x64xbf16>, vector<256x64xf32> -> vector<256x64xf32>
    %c0_3 = arith.constant 0 : index
    %c0_4 = arith.constant 0 : index
    %3 = vector.load %arg4[%c0_3, %c0_4] : memref<1x64xf32, #tpu.memory_space<vmem>>, vector<1x64xf32>
    %4 = vector.broadcast %3 : vector<1x64xf32> to vector<256x64xf32>
    %5 = arith.mulf %2, %4 : vector<256x64xf32>
    %c0_5 = arith.constant 0 : index
    %c0_6 = arith.constant 0 : index
    %6 = vector.load %arg5[%c0_5, %c0_6] : memref<1x64xf32, #tpu.memory_space<vmem>>, vector<1x64xf32>
    %7 = vector.broadcast %6 : vector<1x64xf32> to vector<256x64xf32>
    %8 = arith.addf %5, %7 : vector<256x64xf32>
    %cst_7 = arith.constant 0.000000e+00 : f32
    %9 = vector.broadcast %cst_7 : f32 to vector<256x64xf32>
    %10 = arith.maximumf %8, %9 : vector<256x64xf32>
    %11 = arith.truncf %10 : vector<256x64xf32> to vector<256x64xbf16>
    %c0_8 = arith.constant 0 : index
    %c0_9 = arith.constant 0 : index
    %12 = vector.load %arg6[%c0_8, %c0_9] : memref<256x64xbf16, #tpu.memory_space<vmem>>, vector<256x64xbf16>
    tpu.vector_store %arg6[%c0_8, %c0_9], %11 {strides = array<i32>} : memref<256x64xbf16, #tpu.memory_space<vmem>>, vector<256x64xbf16>,
    return
  }
  func.func @transform_0(%arg0: i32, %arg1: i32) -> (i32, i32) {
    %c0_i32 = arith.constant 0 : i32
    %c0_i32_0 = arith.constant 0 : i32
    return %arg0, %c0_i32 : i32, i32
  }
  func.func @transform_1(%arg0: i32, %arg1: i32) -> (i32, i32) {
    %c0_i32 = arith.constant 0 : i32
    %c0_i32_0 = arith.constant 0 : i32
    return %c0_i32, %arg1 : i32, i32
  }
  func.func @transform_2(%arg0: i32, %arg1: i32) -> (i32, i32) {
    %c0_i32 = arith.constant 0 : i32
    %c0_i32_0 = arith.constant 0 : i32
    return %c0_i32, %arg1 : i32, i32
  }
  func.func @transform_3(%arg0: i32, %arg1: i32) -> (i32, i32) {
    %c0_i32 = arith.constant 0 : i32
    %c0_i32_0 = arith.constant 0 : i32
    return %c0_i32, %arg1 : i32, i32
  }
  func.func @transform_4(%arg0: i32, %arg1: i32) -> (i32, i32) {
    %c0_i32 = arith.constant 0 : i32
    return %arg0, %arg1 : i32, i32
  }
}

</mosaic_0001>

<llo_original>
// kernel: tpu_custom_call.1
$region0: #{tpu_custom_call.1}
  #allocation0 [shape = 'u32[]', space=smem, size = 0x4, offset = 0x4, fixed_abs, tag = 'smem constant byte address 0x4 - core index']
  #allocation1 [shape = 'u32[72,128]{1,0:T(1,128)}', space=vmem, size = 0x9000, scoped, tag = 'internal scratch']
  %s0 = inlined_call_operand.hbm [shape: bf16[2048,256], index: 0, kind: input, shape index: {}]
  %s1 = inlined_call_operand.vmem [shape: bf16[256,64], index: 1, kind: input, shape index: {}]
  %s2 = inlined_call_operand.vmem [shape: f32[1,64], index: 2, kind: input, shape index: {}]
  %s3 = inlined_call_operand.vmem [shape: f32[1,64], index: 3, kind: input, shape index: {}]
  %s4 = inlined_call_operand.vmem [shape: bf16[2048,64], index: 4, kind: output, shape index: {}]
  %s5 = sld [smem:[#allocation0]]
  $region53: #{tpu_custom_call.1} parent=0
    _
  %s7 = ssub.s32 1, %s5
  %s8 = scalar_select 0, %s7, %s5
  $region1: #{tpu_custom_call.1} parent=0
    #allocation2 [shape = 'u8[262144]{0}', space=vmem, size = 0x40000, scoped, tag = 'input window, operand 0']
    #allocation3 [shape = 's32[2]{0}', space=sflag, size = 0x8, scoped, tag = 'scoped memory for tpu_custom_call.1']
    %9 = vsyncpa [#allocation3], 0
    %s10 = scalar_lea.sflag [#allocation3], 1
    %11 = vsyncpa %s10, 0
    loop: start=0, step=1, limit=10
    $region2: #{tpu_custom_call.1} parent=1 // loop_pre_header
      _
    $region3: #{tpu_custom_call.1} parent=1 // loop_header
      %s13 = sphi 0, %s17
      %p14 = scmp.ge.s32.totalorder %s13, 10
      %s20 = sphi 0, %s32
      %s21 = sphi 0, %s28
      %s22 = sphi 0, %s20
      %s23 = sphi 0, %s21
      %s24 = sphi 0, %s22
      %s25 = sphi 0, %s23
      %s35 = sphi 0, %s37
      %s38 = sphi 0, %s35
      %s39 = sphi 0, %s38
      %s55 = sphi 0, %s39
      %s61 = sphi 0, %s63
      %s64 = sphi 0, %s61
      %s65 = sphi 0, %s64
      %s81 = sphi 0, %s65
      %s87 = sphi 0, %s89
      %s90 = sphi 0, %s87
      %s91 = sphi 0, %s90
      %s107 = sphi 0, %s91
      %s113 = sphi 0, %s115
      %s116 = sphi 0, %s113
      %s117 = sphi 0, %s116
      %s133 = sphi 0, %s117
      %s141 = sphi 0, %s143
      %s144 = sphi 0, %s141
      %s145 = sphi 0, %s144
      %s161 = sphi 0, %s145
    $region4: #{tpu_custom_call.1} parent=1 // loop_header_branch
      %16 = sbr.rel (%p14) target = $region8
    $region5: #{tpu_custom_call.1} parent=1 // loop_body
      %s18 = ssub.s32 %s13, 1
      %s19 = ssub.s32 %s13, 2
      %s26 = sadd.s32 1, %s21
      %p27 = scmp.ge.s32.totalorder %s26, 1
      %s28 = scalar_select %p27, 0, %s26
      %s29 = sadd.s32 1, %s20
      %s30 = scalar_select %p27, %s29, %s20
      %p31 = scmp.ge.s32.totalorder %s30, 8
      %s32 = scalar_select %p31, 0, %s30
      %s33 = ssub.s32 %s20, %s32
      %p34 = scmp.eq.s32.totalorder %s33, 0
      %s36 = sadd.s32 %s35, 1
      %s37 = scalar_select %p34, %s35, %s36
      %p40 = pneg %p34
      %p41 = scmp.eq.s32.totalorder %s13, 7
      %p42 = por %p40, %p41
      %p43 = scmp.ne.s32.totalorder %s35, %s38
      %p44 = scmp.eq.s32.totalorder %s13, 0
      %p45 = por %p43, %p44
      %p46 = scmp.ne.s32.totalorder %s35, %s38
      %p47 = scmp.eq.s32.totalorder %s18, 7
      %p48 = por %p46, %p47
      %p49 = scmp.ne.s32.totalorder %s38, %s39
      %p50 = scmp.eq.s32.totalorder %s18, 0
      %p51 = por %p49, %p50
      %p52 = scmp.ne.s32.totalorder %s38, %s39
      %p53 = scmp.eq.s32.totalorder %s19, 7
      %p54 = por %p52, %p53
      %p56 = scmp.ne.s32.totalorder %s39, %s55
      %p57 = scmp.eq.s32.totalorder %s19, 0
      %p58 = por %p56, %p57
      %s59 = ssub.s32 %s21, %s28
      %p60 = scmp.eq.s32.totalorder %s59, 0
      %s62 = sadd.s32 %s61, 1
      %s63 = scalar_select %p60, %s61, %s62
      %p66 = pneg %p60
      %p67 = scmp.eq.s32.totalorder %s13, 7
      %p68 = por %p66, %p67
      %p69 = scmp.ne.s32.totalorder %s61, %s64
      %p70 = scmp.eq.s32.totalorder %s13, 0
      %p71 = por %p69, %p70
      %p72 = scmp.ne.s32.totalorder %s61, %s64
      %p73 = scmp.eq.s32.totalorder %s18, 7
      %p74 = por %p72, %p73
      %p75 = scmp.ne.s32.totalorder %s64, %s65
      %p76 = scmp.eq.s32.totalorder %s18, 0
      %p77 = por %p75, %p76
      %p78 = scmp.ne.s32.totalorder %s64, %s65
      %p79 = scmp.eq.s32.totalorder %s19, 7
      %p80 = por %p78, %p79
      %p82 = scmp.ne.s32.totalorder %s65, %s81
      %p83 = scmp.eq.s32.totalorder %s19, 0
      %p84 = por %p82, %p83
      %s85 = ssub.s32 %s21, %s28
      %p86 = scmp.eq.s32.totalorder %s85, 0
      %s88 = sadd.s32 %s87, 1
      %s89 = scalar_select %p86, %s87, %s88
      %p92 = pneg %p86
      %p93 = scmp.eq.s32.totalorder %s13, 7
      %p94 = por %p92, %p93
      %p95 = scmp.ne.s32.totalorder %s87, %s90
      %p96 = scmp.eq.s32.totalorder %s13, 0
      %p97 = por %p95, %p96
      %p98 = scmp.ne.s32.totalorder %s87, %s90
      %p99 = scmp.eq.s32.totalorder %s18, 7
      %p100 = por %p98, %p99
      %p101 = scmp.ne.s32.totalorder %s90, %s91
      %p102 = scmp.eq.s32.totalorder %s18, 0
      %p103 = por %p101, %p102
      %p104 = scmp.ne.s32.totalorder %s90, %s91
      %p105 = scmp.eq.s32.totalorder %s19, 7
      %p106 = por %p104, %p105
      %p108 = scmp.ne.s32.totalorder %s91, %s107
      %p109 = scmp.eq.s32.totalorder %s19, 0
      %p110 = por %p108, %p109
      %s111 = ssub.s32 %s21, %s28
      %p112 = scmp.eq.s32.totalorder %s111, 0
      %s114 = sadd.s32 %s113, 1
      %s115 = scalar_select %p112, %s113, %s114
      %p118 = pneg %p112
      %p119 = scmp.eq.s32.totalorder %s13, 7
      %p120 = por %p118, %p119
      %p121 = scmp.ne.s32.totalorder %s113, %s116
      %p122 = scmp.eq.s32.totalorder %s13, 0
      %p123 = por %p121, %p122
      %p124 = scmp.ne.s32.totalorder %s113, %s116
      %p125 = scmp.eq.s32.totalorder %s18, 7
      %p126 = por %p124, %p125
      %p127 = scmp.ne.s32.totalorder %s116, %s117
      %p128 = scmp.eq.s32.totalorder %s18, 0
      %p129 = por %p127, %p128
      %p130 = scmp.ne.s32.totalorder %s116, %s117
      %p131 = scmp.eq.s32.totalorder %s19, 7
      %p132 = por %p130, %p131
      %p134 = scmp.ne.s32.totalorder %s117, %s133
      %p135 = scmp.eq.s32.totalorder %s19, 0
      %p136 = por %p134, %p135
      %s137 = ssub.s32 %s20, %s32
      %s138 = ssub.s32 %s21, %s28
      %s139 = sor.u32 %s137, %s138
      %p140 = scmp.eq.s32.totalorder %s139, 0
      %s142 = sadd.s32 %s141, 1
      %s143 = scalar_select %p140, %s141, %s142
      %p146 = pneg %p140
      %p147 = scmp.eq.s32.totalorder %s13, 7
      %p148 = por %p146, %p147
      %p149 = scmp.ne.s32.totalorder %s141, %s144
      %p150 = scmp.eq.s32.totalorder %s13, 0
      %p151 = por %p149, %p150
      %p152 = scmp.ne.s32.totalorder %s141, %s144
      %p153 = scmp.eq.s32.totalorder %s18, 7
      %p154 = por %p152, %p153
      %p155 = scmp.ne.s32.totalorder %s144, %s145
      %p156 = scmp.eq.s32.totalorder %s18, 0
      %p157 = por %p155, %p156
      %p158 = scmp.ne.s32.totalorder %s144, %s145
      %p159 = scmp.eq.s32.totalorder %s19, 7
      %p160 = por %p158, %p159
      %p162 = scmp.ne.s32.totalorder %s145, %s161
      %p163 = scmp.eq.s32.totalorder %s19, 0
      %p164 = por %p162, %p163
      %p165 = scmp.le.s32.totalorder 1, %s13
      %p166 = scmp.lt.s32.totalorder %s13, 9
      %p167 = pnand %p165, %p166
      %p168 = pneg %p167
      // Predicated region
      $region9: #{tpu_custom_call.1} parent=5 // pred_check
        _
      $region10: #{tpu_custom_call.1} parent=5 // pred_check_branch
        %170 = sbr.rel (%p167) target = $region12
      $region11: #{tpu_custom_call.1} parent=5 // pred_region
        %s171 = ssub.s32 %s13, 1
        // Predicated region
        $region13: #{tpu_custom_call.1} parent=11 // pred_check
          %p172 = pneg %p77
        $region14: #{tpu_custom_call.1} parent=11 // pred_check_branch
          %174 = sbr.rel (%p172) target = $region16
        $region15: #{tpu_custom_call.1} parent=11 // pred_region
          %p175 = scmp.lt.s32.totalorder %s23, 0
          %s176 = scalar_select %p175, %s23, 0
          %s177 = smul.addr %s176, 4
          %s178 = scalar_lea.vmem %s1, %s177
        $region16: #{tpu_custom_call.1} parent=11 // pred_fallthru
          _
        // Predicated region
        $region17: #{tpu_custom_call.1} parent=11 // pred_check
          %p179 = pneg %p103
        $region18: #{tpu_custom_call.1} parent=11 // pred_check_branch
          %181 = sbr.rel (%p179) target = $region20
        $region19: #{tpu_custom_call.1} parent=11 // pred_region
          %p182 = scmp.lt.s32.totalorder %s23, 0
          %s183 = scalar_select %p182, %s23, 0
          %s184 = scalar_lea.vmem %s2, %s183
        $region20: #{tpu_custom_call.1} parent=11 // pred_fallthru
          _
        // Predicated region
        $region21: #{tpu_custom_call.1} parent=11 // pred_check
          %p185 = pneg %p129
        $region22: #{tpu_custom_call.1} parent=11 // pred_check_branch
          %187 = sbr.rel (%p185) target = $region24
        $region23: #{tpu_custom_call.1} parent=11 // pred_region
          %p188 = scmp.lt.s32.totalorder %s23, 0
          %s189 = scalar_select %p188, %s23, 0
          %s190 = scalar_lea.vmem %s3, %s189
        $region24: #{tpu_custom_call.1} parent=11 // pred_fallthru
          _
      $region12: #{tpu_custom_call.1} parent=5 // pred_fallthru
        _
      %p191 = scmp.lt.s32.totalorder %s13, 8
      // Predicated region
      $region25: #{tpu_custom_call.1} parent=5 // pred_check
        %p192 = pneg %p191
      $region26: #{tpu_custom_call.1} parent=5 // pred_check_branch
        %194 = sbr.rel (%p192) target = $region28
      $region27: #{tpu_custom_call.1} parent=5 // pred_region
        // Predicated region
        $region29: #{tpu_custom_call.1} parent=27 // pred_check
          %p195 = pneg %p45
        $region30: #{tpu_custom_call.1} parent=27 // pred_check_branch
          %197 = sbr.rel (%p195) target = $region32
        $region31: #{tpu_custom_call.1} parent=27 // pred_region
          %s198 = sand.u32 %s35, 1
          %s199 = scalar_lea.sflag [#allocation3], %s198
          %s200 = sand.u32 %s35, 1
          %s201 = smul.addr %s200, 256
          %s202 = scalar_lea.vmem [#allocation2], %s201
          %s203 = smul.u32 32, %s20
          %205 = vsyncadd %s199, 0
          %s206 = smul.addr %s203, 2
          %s207 = smul.addr %s206, 4
          %s208 = scalar_lea.hbm %s0, %s207
          %s209 = sshll.u32 %s208, 4
          %s210 = int_to_ptr.hbm [resolvable:$true] %s209
          %s211 = sshll.u32 %s202, 4
          %s212 = int_to_ptr.vmem [resolvable:$true] %s211
          %217 = dma.hbm_to_vmem [thread:$0]  %s210, 4096, %s212, %s199, 128, 128, 8
        $region32: #{tpu_custom_call.1} parent=27 // pred_fallthru
          _
      $region28: #{tpu_custom_call.1} parent=5 // pred_fallthru
        _
      %p218 = scmp.le.s32.totalorder 1, %s13
      %p219 = scmp.lt.s32.totalorder %s13, 9
      %p220 = pnand %p218, %p219
      %p221 = pneg %p220
      // Predicated region
      $region33: #{tpu_custom_call.1} parent=5 // pred_check
        _
      $region34: #{tpu_custom_call.1} parent=5 // pred_check_branch
        %223 = sbr.rel (%p220) target = $region36
      $region35: #{tpu_custom_call.1} parent=5 // pred_region
        %s224 = ssub.s32 %s13, 1
        %s225 = sand.u32 %s38, 1
        %s226 = scalar_lea.sflag [#allocation3], %s225
        %s227 = sand.u32 %s38, 1
        %s228 = smul.addr %s227, 256
        %s229 = scalar_lea.vmem [#allocation2], %s228
        // Predicated region
        $region37: #{tpu_custom_call.1} parent=35 // pred_check
          %p230 = pneg %p51
        $region38: #{tpu_custom_call.1} parent=35 // pred_check_branch
          %232 = sbr.rel (%p230) target = $region40
        $region39: #{tpu_custom_call.1} parent=35 // pred_region
          %234 = dma.done %s226, 4096
        $region40: #{tpu_custom_call.1} parent=35 // pred_fallthru
          _
        %s235 = sand.u32 %s38, 1
        %s236 = scalar_lea.sflag [#allocation3], %s235
        %s237 = sand.u32 %s38, 1
        %s238 = smul.addr %s237, 256
        %s239 = scalar_lea.vmem [#allocation2], %s238
        %p240 = pneg %p51
        %p241 = pneg %p48
        %p242 = scmp.lt.s32.totalorder %s23, 0
        %s243 = scalar_select %p242, %s23, 0
        %s244 = smul.addr %s243, 4
        %s245 = scalar_lea.vmem %s1, %s244
        %p246 = pneg %p77
        %p247 = pneg %p74
        %p248 = scmp.lt.s32.totalorder %s23, 0
        %s249 = scalar_select %p248, %s23, 0
        %s250 = scalar_lea.vmem %s2, %s249
        %p251 = pneg %p103
        %p252 = pneg %p100
        %p253 = scmp.lt.s32.totalorder %s23, 0
        %s254 = scalar_select %p253, %s23, 0
        %s255 = scalar_lea.vmem %s3, %s254
        %p256 = pneg %p129
        %p257 = pneg %p126
        %p258 = pneg %p157
        %p259 = pneg %p154
        %s260 = smul.u32 32, %s22
        %p261 = scmp.lt.s32.totalorder %s260, 255
        %s262 = scalar_select %p261, %s260, 255
        %p263 = scmp.lt.s32.totalorder %s23, 0
        %s264 = scalar_select %p263, %s23, 0
        %s265 = sadd.s32 %s264, %s262
        %s266 = smul.addr %s265, 4
        %s267 = scalar_lea.vmem %s4, %s266
        %s268 = smul.u32 32, %s22
        %p269 = scmp.lt.s32.totalorder %s23, 0
        %s270 = scalar_select %p269, %s23, 0
        %s271 = smul.addr %s270, 4
        %s272 = scalar_lea.vmem %s1, %s271
        %p273 = scmp.lt.s32.totalorder %s23, 0
        %s274 = scalar_select %p273, %s23, 0
        %s275 = scalar_lea.vmem %s2, %s274
        %p276 = scmp.lt.s32.totalorder %s23, 0
        %s277 = scalar_select %p276, %s23, 0
        %s278 = scalar_lea.vmem %s3, %s277
        %s279 = smul.u32 32, %s22
        %p280 = scmp.lt.s32.totalorder %s279, 255
        %s281 = scalar_select %p280, %s279, 255
        %p282 = scmp.lt.s32.totalorder %s23, 0
        %s283 = scalar_select %p282, %s23, 0
        %s284 = sadd.s32 %s283, %s281
        %s285 = smul.addr %s284, 4
        %s286 = scalar_lea.vmem %s4, %s285
        %s287 = smul.u32 32, %s22
        %v288 = vld [vmem:[%s229] sm:$0xff]
        %v289 = vld [vmem:[%s229 + $0x8] sm:$0xff]
        %v290 = vld [vmem:[%s229 + $0x10] sm:$0xff]
        %v291 = vld [vmem:[%s229 + $0x18] sm:$0xff]
        %v292 = vld [vmem:[%s229 + $0x20] sm:$0xff]
        %v293 = vld [vmem:[%s229 + $0x28] sm:$0xff]
        %v294 = vld [vmem:[%s229 + $0x30] sm:$0xff]
        %v295 = vld [vmem:[%s229 + $0x38] sm:$0xff]
        %v296 = vld [vmem:[%s229 + $0x40] sm:$0xff]
        %v297 = vld [vmem:[%s229 + $0x48] sm:$0xff]
        %v298 = vld [vmem:[%s229 + $0x50] sm:$0xff]
        %v299 = vld [vmem:[%s229 + $0x58] sm:$0xff]
        %v300 = vld [vmem:[%s229 + $0x60] sm:$0xff]
        %v301 = vld [vmem:[%s229 + $0x68] sm:$0xff]
        %v302 = vld [vmem:[%s229 + $0x70] sm:$0xff]
        %v303 = vld [vmem:[%s229 + $0x78] sm:$0xff]
        %v304 = vld [vmem:[%s229 + $0x80] sm:$0xff]
        %v305 = vld [vmem:[%s229 + $0x88] sm:$0xff]
        %v306 = vld [vmem:[%s229 + $0x90] sm:$0xff]
        %v307 = vld [vmem:[%s229 + $0x98] sm:$0xff]
        %v308 = vld [vmem:[%s229 + $0xa0] sm:$0xff]
        %v309 = vld [vmem:[%s229 + $0xa8] sm:$0xff]
        %v310 = vld [vmem:[%s229 + $0xb0] sm:$0xff]
        %v311 = vld [vmem:[%s229 + $0xb8] sm:$0xff]
        %v312 = vld [vmem:[%s229 + $0xc0] sm:$0xff]
        %v313 = vld [vmem:[%s229 + $0xc8] sm:$0xff]
        %v314 = vld [vmem:[%s229 + $0xd0] sm:$0xff]
        %v315 = vld [vmem:[%s229 + $0xd8] sm:$0xff]
        %v316 = vld [vmem:[%s229 + $0xe0] sm:$0xff]
        %v317 = vld [vmem:[%s229 + $0xe8] sm:$0xff]
        %v318 = vld [vmem:[%s229 + $0xf0] sm:$0xff]
        %v319 = vld [vmem:[%s229 + $0xf8] sm:$0xff]
        %v320 = vld [vmem:[%s272] sm:$0xf]
        %v321 = vld [vmem:[%s272 + $0x4] sm:$0xf]
        %v322 = vld [vmem:[%s272 + $0x8] sm:$0xf]
        %v323 = vld [vmem:[%s272 + $0xc] sm:$0xf]
        %v324 = vld [vmem:[%s272 + $0x10] sm:$0xf]
        %v325 = vld [vmem:[%s272 + $0x14] sm:$0xf]
        %v326 = vld [vmem:[%s272 + $0x18] sm:$0xf]
        %v327 = vld [vmem:[%s272 + $0x1c] sm:$0xf]
        %v328 = vld [vmem:[%s272 + $0x20] sm:$0xf]
        %v329 = vld [vmem:[%s272 + $0x24] sm:$0xf]
        %v330 = vld [vmem:[%s272 + $0x28] sm:$0xf]
        %v331 = vld [vmem:[%s272 + $0x2c] sm:$0xf]
        %v332 = vld [vmem:[%s272 + $0x30] sm:$0xf]
        %v333 = vld [vmem:[%s272 + $0x34] sm:$0xf]
        %v334 = vld [vmem:[%s272 + $0x38] sm:$0xf]
        %v335 = vld [vmem:[%s272 + $0x3c] sm:$0xf]
        %v336 = vld [vmem:[%s272 + $0x40] sm:$0xf]
        %v337 = vld [vmem:[%s272 + $0x44] sm:$0xf]
        %v338 = vld [vmem:[%s272 + $0x48] sm:$0xf]
        %v339 = vld [vmem:[%s272 + $0x4c] sm:$0xf]
        %v340 = vld [vmem:[%s272 + $0x50] sm:$0xf]
        %v341 = vld [vmem:[%s272 + $0x54] sm:$0xf]
        %v342 = vld [vmem:[%s272 + $0x58] sm:$0xf]
        %v343 = vld [vmem:[%s272 + $0x5c] sm:$0xf]
        %v344 = vld [vmem:[%s272 + $0x60] sm:$0xf]
        %v345 = vld [vmem:[%s272 + $0x64] sm:$0xf]
        %v346 = vld [vmem:[%s272 + $0x68] sm:$0xf]
        %v347 = vld [vmem:[%s272 + $0x6c] sm:$0xf]
        %v348 = vld [vmem:[%s272 + $0x70] sm:$0xf]
        %v349 = vld [vmem:[%s272 + $0x74] sm:$0xf]
        %v350 = vld [vmem:[%s272 + $0x78] sm:$0xf]
        %v351 = vld [vmem:[%s272 + $0x7c] sm:$0xf]
        %v384 = vunpack.c.l.b16 %v288
        %v385 = vunpack.c.h.b16 %v288
        %v386 = vunpack.c.l.b16 %v289
        %v387 = vunpack.c.h.b16 %v289
        %v388 = vunpack.c.l.b16 %v290
        %v389 = vunpack.c.h.b16 %v290
        %v390 = vunpack.c.l.b16 %v291
        %v391 = vunpack.c.h.b16 %v291
        %v392 = vunpack.c.l.b16 %v292
        %v393 = vunpack.c.h.b16 %v292
        %v394 = vunpack.c.l.b16 %v293
        %v395 = vunpack.c.h.b16 %v293
        %v396 = vunpack.c.l.b16 %v294
        %v397 = vunpack.c.h.b16 %v294
        %v398 = vunpack.c.l.b16 %v295
        %v399 = vunpack.c.h.b16 %v295
        %v400 = vunpack.c.l.b16 %v296
        %v401 = vunpack.c.h.b16 %v296
        %v402 = vunpack.c.l.b16 %v297
        %v403 = vunpack.c.h.b16 %v297
        %v404 = vunpack.c.l.b16 %v298
        %v405 = vunpack.c.h.b16 %v298
        %v406 = vunpack.c.l.b16 %v299
        %v407 = vunpack.c.h.b16 %v299
        %v408 = vunpack.c.l.b16 %v300
        %v409 = vunpack.c.h.b16 %v300
        %v410 = vunpack.c.l.b16 %v301
        %v411 = vunpack.c.h.b16 %v301
        %v412 = vunpack.c.l.b16 %v302
        %v413 = vunpack.c.h.b16 %v302
        %v414 = vunpack.c.l.b16 %v303
        %v415 = vunpack.c.h.b16 %v303
        %v416 = vunpack.c.l.b16 %v304
        %v417 = vunpack.c.h.b16 %v304
        %v418 = vunpack.c.l.b16 %v305
        %v419 = vunpack.c.h.b16 %v305
        %v420 = vunpack.c.l.b16 %v306
        %v421 = vunpack.c.h.b16 %v306
        %v422 = vunpack.c.l.b16 %v307
        %v423 = vunpack.c.h.b16 %v307
        %v424 = vunpack.c.l.b16 %v308
        %v425 = vunpack.c.h.b16 %v308
        %v426 = vunpack.c.l.b16 %v309
        %v427 = vunpack.c.h.b16 %v309
        %v428 = vunpack.c.l.b16 %v310
        %v429 = vunpack.c.h.b16 %v310
        %v430 = vunpack.c.l.b16 %v311
        %v431 = vunpack.c.h.b16 %v311
        %v432 = vunpack.c.l.b16 %v312
        %v433 = vunpack.c.h.b16 %v312
        %v434 = vunpack.c.l.b16 %v313
        %v435 = vunpack.c.h.b16 %v313
        %v436 = vunpack.c.l.b16 %v314
        %v437 = vunpack.c.h.b16 %v314
        %v438 = vunpack.c.l.b16 %v315
        %v439 = vunpack.c.h.b16 %v315
        %v440 = vunpack.c.l.b16 %v316
        %v441 = vunpack.c.h.b16 %v316
        %v442 = vunpack.c.l.b16 %v317
        %v443 = vunpack.c.h.b16 %v317
        %v444 = vunpack.c.l.b16 %v318
        %v445 = vunpack.c.h.b16 %v318
        %v446 = vunpack.c.l.b16 %v319
        %v447 = vunpack.c.h.b16 %v319
        %v448 = vpack.c.b16 %v386, %v384
        %v449 = vpack.c.b16 %v387, %v385
        %v450 = vpack.c.b16 %v390, %v388
        %v451 = vpack.c.b16 %v391, %v389
        %v452 = vpack.c.b16 %v394, %v392
        %v453 = vpack.c.b16 %v395, %v393
        %v454 = vpack.c.b16 %v398, %v396
        %v455 = vpack.c.b16 %v399, %v397
        %v456 = vpack.c.b16 %v402, %v400
        %v457 = vpack.c.b16 %v403, %v401
        %v458 = vpack.c.b16 %v406, %v404
        %v459 = vpack.c.b16 %v407, %v405
        %v460 = vpack.c.b16 %v410, %v408
        %v461 = vpack.c.b16 %v411, %v409
        %v462 = vpack.c.b16 %v414, %v412
        %v463 = vpack.c.b16 %v415, %v413
        %v464 = vpack.c.b16 %v418, %v416
        %v465 = vpack.c.b16 %v419, %v417
        %v466 = vpack.c.b16 %v422, %v420
        %v467 = vpack.c.b16 %v423, %v421
        %v468 = vpack.c.b16 %v426, %v424
        %v469 = vpack.c.b16 %v427, %v425
        %v470 = vpack.c.b16 %v430, %v428
        %v471 = vpack.c.b16 %v431, %v429
        %v472 = vpack.c.b16 %v434, %v432
        %v473 = vpack.c.b16 %v435, %v433
        %v474 = vpack.c.b16 %v438, %v436
        %v475 = vpack.c.b16 %v439, %v437
        %v476 = vpack.c.b16 %v442, %v440
        %v477 = vpack.c.b16 %v443, %v441
        %v478 = vpack.c.b16 %v446, %v444
        %v479 = vpack.c.b16 %v447, %v445
        %v544 = vunpack.c.l.b16 %v320
        %v545 = vunpack.c.l.b16 %v321
        %v546 = vunpack.c.l.b16 %v322
        %v547 = vunpack.c.l.b16 %v323
        %v548 = vunpack.c.l.b16 %v324
        %v549 = vunpack.c.l.b16 %v325
        %v550 = vunpack.c.l.b16 %v326
        %v551 = vunpack.c.l.b16 %v327
        %v552 = vunpack.c.l.b16 %v328
        %v553 = vunpack.c.l.b16 %v329
        %v554 = vunpack.c.l.b16 %v330
        %v555 = vunpack.c.l.b16 %v331
        %v556 = vunpack.c.l.b16 %v332
        %v557 = vunpack.c.l.b16 %v333
        %v558 = vunpack.c.l.b16 %v334
        %v559 = vunpack.c.l.b16 %v335
        %v560 = vunpack.c.l.b16 %v336
        %v561 = vunpack.c.l.b16 %v337
        %v562 = vunpack.c.l.b16 %v338
        %v563 = vunpack.c.l.b16 %v339
        %v564 = vunpack.c.l.b16 %v340
        %v565 = vunpack.c.l.b16 %v341
        %v566 = vunpack.c.l.b16 %v342
        %v567 = vunpack.c.l.b16 %v343
        %v568 = vunpack.c.l.b16 %v344
        %v569 = vunpack.c.l.b16 %v345
        %v570 = vunpack.c.l.b16 %v346
        %v571 = vunpack.c.l.b16 %v347
        %v572 = vunpack.c.l.b16 %v348
        %v573 = vunpack.c.l.b16 %v349
        %v574 = vunpack.c.l.b16 %v350
        %v575 = vunpack.c.l.b16 %v351
        %v576 = vpack.c.b16 %v545, %v544
        %v577 = vpack.c.b16 %v547, %v546
        %v578 = vpack.c.b16 %v549, %v548
        %v579 = vpack.c.b16 %v551, %v550
        %v580 = vpack.c.b16 %v553, %v552
        %v581 = vpack.c.b16 %v555, %v554
        %v582 = vpack.c.b16 %v557, %v556
        %v583 = vpack.c.b16 %v559, %v558
        %v584 = vpack.c.b16 %v561, %v560
        %v585 = vpack.c.b16 %v563, %v562
        %v586 = vpack.c.b16 %v565, %v564
        %v587 = vpack.c.b16 %v567, %v566
        %v588 = vpack.c.b16 %v569, %v568
        %v589 = vpack.c.b16 %v571, %v570
        %v590 = vpack.c.b16 %v573, %v572
        %v591 = vpack.c.b16 %v575, %v574
        %608 = vmatpush.bf16.msra.mxu0 %v583
        %609 = vmatpush.bf16.msra.mxu0 %v582
        %610 = vmatpush.bf16.msra.mxu0 %v581
        %611 = vmatpush.bf16.msra.mxu0 %v580
        %612 = vmatpush.bf16.msra.mxu0 %v579
        %613 = vmatpush.bf16.msra.mxu0 %v578
        %614 = vmatpush.bf16.msra.mxu0 %v577
        %615 = vmatpush.bf16.msra.mxu0 %v576
        %616 = vmatmul.bf16.gmra.mxu0 %v448
        %v617 = vpop.f32.mrf.mxu0
        %v618 = vadd.f32 0.0, %v617
        %v619 = vpop.f32.mrf.mxu0
        %v620 = vadd.f32 0.0, %v619
        %621 = vmatmul.bf16.gmra.mxu0 %v450
        %v622 = vpop.f32.mrf.mxu0
        %v623 = vadd.f32 0.0, %v622
        %v624 = vpop.f32.mrf.mxu0
        %v625 = vadd.f32 0.0, %v624
        %626 = vmatmul.bf16.gmra.mxu0 %v452
        %v627 = vpop.f32.mrf.mxu0
        %v628 = vadd.f32 0.0, %v627
        %v629 = vpop.f32.mrf.mxu0
        %v630 = vadd.f32 0.0, %v629
        %631 = vmatmul.bf16.gmra.mxu0 %v454
        %v632 = vpop.f32.mrf.mxu0
        %v633 = vadd.f32 0.0, %v632
        %v634 = vpop.f32.mrf.mxu0
        %v635 = vadd.f32 0.0, %v634
        %636 = vmatmul.bf16.gmra.mxu0 %v456
        %v637 = vpop.f32.mrf.mxu0
        %v638 = vadd.f32 0.0, %v637
        %v639 = vpop.f32.mrf.mxu0
        %v640 = vadd.f32 0.0, %v639
        %641 = vmatmul.bf16.gmra.mxu0 %v458
        %v642 = vpop.f32.mrf.mxu0
        %v643 = vadd.f32 0.0, %v642
        %v644 = vpop.f32.mrf.mxu0
        %v645 = vadd.f32 0.0, %v644
        %646 = vmatmul.bf16.gmra.mxu0 %v460
        %v647 = vpop.f32.mrf.mxu0
        %v648 = vadd.f32 0.0, %v647
        %v649 = vpop.f32.mrf.mxu0
        %v650 = vadd.f32 0.0, %v649
        %651 = vmatmul.bf16.gmra.mxu0 %v462
        %v652 = vpop.f32.mrf.mxu0
        %v653 = vadd.f32 0.0, %v652
        %v654 = vpop.f32.mrf.mxu0
        %v655 = vadd.f32 0.0, %v654
        %656 = vmatmul.bf16.gmra.mxu0 %v464
        %v657 = vpop.f32.mrf.mxu0
        %v658 = vadd.f32 0.0, %v657
        %v659 = vpop.f32.mrf.mxu0
        %v660 = vadd.f32 0.0, %v659
        %661 = vmatmul.bf16.gmra.mxu0 %v466
        %v662 = vpop.f32.mrf.mxu0
        %v663 = vadd.f32 0.0, %v662
        %v664 = vpop.f32.mrf.mxu0
        %v665 = vadd.f32 0.0, %v664
        %666 = vmatmul.bf16.gmra.mxu0 %v468
        %v667 = vpop.f32.mrf.mxu0
        %v668 = vadd.f32 0.0, %v667
        %v669 = vpop.f32.mrf.mxu0
        %v670 = vadd.f32 0.0, %v669
        %671 = vmatmul.bf16.gmra.mxu0 %v470
        %v672 = vpop.f32.mrf.mxu0
        %v673 = vadd.f32 0.0, %v672
        %v674 = vpop.f32.mrf.mxu0
        %v675 = vadd.f32 0.0, %v674
        %676 = vmatmul.bf16.gmra.mxu0 %v472
        %v677 = vpop.f32.mrf.mxu0
        %v678 = vadd.f32 0.0, %v677
        %v679 = vpop.f32.mrf.mxu0
        %v680 = vadd.f32 0.0, %v679
        %681 = vmatmul.bf16.gmra.mxu0 %v474
        %v682 = vpop.f32.mrf.mxu0
        %v683 = vadd.f32 0.0, %v682
        %v684 = vpop.f32.mrf.mxu0
        %v685 = vadd.f32 0.0, %v684
        %686 = vmatmul.bf16.gmra.mxu0 %v476
        %v687 = vpop.f32.mrf.mxu0
        %v688 = vadd.f32 0.0, %v687
        %v689 = vpop.f32.mrf.mxu0
        %v690 = vadd.f32 0.0, %v689
        %691 = vmatmul.bf16.gmra.mxu0 %v478
        %v692 = vpop.f32.mrf.mxu0
        %v693 = vadd.f32 0.0, %v692
        %v694 = vpop.f32.mrf.mxu0
        %v695 = vadd.f32 0.0, %v694
        %696 = vdwg.mxu0
        %697 = vmatpush.bf16.msra.mxu0 %v591
        %698 = vmatpush.bf16.msra.mxu0 %v590
        %699 = vmatpush.bf16.msra.mxu0 %v589
        %700 = vmatpush.bf16.msra.mxu0 %v588
        %701 = vmatpush.bf16.msra.mxu0 %v587
        %702 = vmatpush.bf16.msra.mxu0 %v586
        %703 = vmatpush.bf16.msra.mxu0 %v585
        %704 = vmatpush.bf16.msra.mxu0 %v584
        %705 = vmatmul.bf16.gmra.mxu0 %v449
        %v706 = vpop.f32.mrf.mxu0
        %v707 = vadd.f32 %v618, %v706
        %v708 = vpop.f32.mrf.mxu0
        %v709 = vadd.f32 %v620, %v708
        %710 = vmatmul.bf16.gmra.mxu0 %v451
        %v711 = vpop.f32.mrf.mxu0
        %v712 = vadd.f32 %v623, %v711
        %v713 = vpop.f32.mrf.mxu0
        %v714 = vadd.f32 %v625, %v713
        %715 = vmatmul.bf16.gmra.mxu0 %v453
        %v716 = vpop.f32.mrf.mxu0
        %v717 = vadd.f32 %v628, %v716
        %v718 = vpop.f32.mrf.mxu0
        %v719 = vadd.f32 %v630, %v718
        %720 = vmatmul.bf16.gmra.mxu0 %v455
        %v721 = vpop.f32.mrf.mxu0
        %v722 = vadd.f32 %v633, %v721
        %v723 = vpop.f32.mrf.mxu0
        %v724 = vadd.f32 %v635, %v723
        %725 = vmatmul.bf16.gmra.mxu0 %v457
        %v726 = vpop.f32.mrf.mxu0
        %v727 = vadd.f32 %v638, %v726
        %v728 = vpop.f32.mrf.mxu0
        %v729 = vadd.f32 %v640, %v728
        %730 = vmatmul.bf16.gmra.mxu0 %v459
        %v731 = vpop.f32.mrf.mxu0
        %v732 = vadd.f32 %v643, %v731
        %v733 = vpop.f32.mrf.mxu0
        %v734 = vadd.f32 %v645, %v733
        %735 = vmatmul.bf16.gmra.mxu0 %v461
        %v736 = vpop.f32.mrf.mxu0
        %v737 = vadd.f32 %v648, %v736
        %v738 = vpop.f32.mrf.mxu0
        %v739 = vadd.f32 %v650, %v738
        %740 = vmatmul.bf16.gmra.mxu0 %v463
        %v741 = vpop.f32.mrf.mxu0
        %v742 = vadd.f32 %v653, %v741
        %v743 = vpop.f32.mrf.mxu0
        %v744 = vadd.f32 %v655, %v743
        %745 = vmatmul.bf16.gmra.mxu0 %v465
        %v746 = vpop.f32.mrf.mxu0
        %v747 = vadd.f32 %v658, %v746
        %v748 = vpop.f32.mrf.mxu0
        %v749 = vadd.f32 %v660, %v748
        %750 = vmatmul.bf16.gmra.mxu0 %v467
        %v751 = vpop.f32.mrf.mxu0
        %v752 = vadd.f32 %v663, %v751
        %v753 = vpop.f32.mrf.mxu0
        %v754 = vadd.f32 %v665, %v753
        %755 = vmatmul.bf16.gmra.mxu0 %v469
        %v756 = vpop.f32.mrf.mxu0
        %v757 = vadd.f32 %v668, %v756
        %v758 = vpop.f32.mrf.mxu0
        %v759 = vadd.f32 %v670, %v758
        %760 = vmatmul.bf16.gmra.mxu0 %v471
        %v761 = vpop.f32.mrf.mxu0
        %v762 = vadd.f32 %v673, %v761
        %v763 = vpop.f32.mrf.mxu0
        %v764 = vadd.f32 %v675, %v763
        %765 = vmatmul.bf16.gmra.mxu0 %v473
        %v766 = vpop.f32.mrf.mxu0
        %v767 = vadd.f32 %v678, %v766
        %v768 = vpop.f32.mrf.mxu0
        %v769 = vadd.f32 %v680, %v768
        %770 = vmatmul.bf16.gmra.mxu0 %v475
        %v771 = vpop.f32.mrf.mxu0
        %v772 = vadd.f32 %v683, %v771
        %v773 = vpop.f32.mrf.mxu0
        %v774 = vadd.f32 %v685, %v773
        %775 = vmatmul.bf16.gmra.mxu0 %v477
        %v776 = vpop.f32.mrf.mxu0
        %v777 = vadd.f32 %v688, %v776
        %v778 = vpop.f32.mrf.mxu0
        %v779 = vadd.f32 %v690, %v778
        %780 = vmatmul.bf16.gmra.mxu0 %v479
        %v781 = vpop.f32.mrf.mxu0
        %v782 = vadd.f32 %v693, %v781
        %v783 = vpop.f32.mrf.mxu0
        %v784 = vadd.f32 %v695, %v783
        %785 = vdwg.mxu0
        %v786 = vld [vmem:[%s275] sm:$0x1]
        %v788 = vperm.slane %v786, 0
        %v790 = vmul.f32 %v707, %v788
        %v791 = vmul.f32 %v709, %v788
        %v792 = vmul.f32 %v712, %v788
        %v793 = vmul.f32 %v714, %v788
        %v794 = vmul.f32 %v717, %v788
        %v795 = vmul.f32 %v719, %v788
        %v796 = vmul.f32 %v722, %v788
        %v797 = vmul.f32 %v724, %v788
        %v798 = vmul.f32 %v727, %v788
        %v799 = vmul.f32 %v729, %v788
        %v800 = vmul.f32 %v732, %v788
        %v801 = vmul.f32 %v734, %v788
        %v802 = vmul.f32 %v737, %v788
        %v803 = vmul.f32 %v739, %v788
        %v804 = vmul.f32 %v742, %v788
        %v805 = vmul.f32 %v744, %v788
        %v806 = vmul.f32 %v747, %v788
        %v807 = vmul.f32 %v749, %v788
        %v808 = vmul.f32 %v752, %v788
        %v809 = vmul.f32 %v754, %v788
        %v810 = vmul.f32 %v757, %v788
        %v811 = vmul.f32 %v759, %v788
        %v812 = vmul.f32 %v762, %v788
        %v813 = vmul.f32 %v764, %v788
        %v814 = vmul.f32 %v767, %v788
        %v815 = vmul.f32 %v769, %v788
        %v816 = vmul.f32 %v772, %v788
        %v817 = vmul.f32 %v774, %v788
        %v818 = vmul.f32 %v777, %v788
        %v819 = vmul.f32 %v779, %v788
        %v820 = vmul.f32 %v782, %v788
        %v821 = vmul.f32 %v784, %v788
        %v822 = vld [vmem:[%s278] sm:$0x1]
        %v824 = vperm.slane %v822, 0
        %v826 = vadd.f32 %v790, %v824
        %v827 = vadd.f32 %v791, %v824
        %v828 = vadd.f32 %v792, %v824
        %v829 = vadd.f32 %v793, %v824
        %v830 = vadd.f32 %v794, %v824
        %v831 = vadd.f32 %v795, %v824
        %v832 = vadd.f32 %v796, %v824
        %v833 = vadd.f32 %v797, %v824
        %v834 = vadd.f32 %v798, %v824
        %v835 = vadd.f32 %v799, %v824
        %v836 = vadd.f32 %v800, %v824
        %v837 = vadd.f32 %v801, %v824
        %v838 = vadd.f32 %v802, %v824
        %v839 = vadd.f32 %v803, %v824
        %v840 = vadd.f32 %v804, %v824
        %v841 = vadd.f32 %v805, %v824
        %v842 = vadd.f32 %v806, %v824
        %v843 = vadd.f32 %v807, %v824
        %v844 = vadd.f32 %v808, %v824
        %v845 = vadd.f32 %v809, %v824
        %v846 = vadd.f32 %v810, %v824
        %v847 = vadd.f32 %v811, %v824
        %v848 = vadd.f32 %v812, %v824
        %v849 = vadd.f32 %v813, %v824
        %v850 = vadd.f32 %v814, %v824
        %v851 = vadd.f32 %v815, %v824
        %v852 = vadd.f32 %v816, %v824
        %v853 = vadd.f32 %v817, %v824
        %v854 = vadd.f32 %v818, %v824
        %v855 = vadd.f32 %v819, %v824
        %v856 = vadd.f32 %v820, %v824
        %v857 = vadd.f32 %v821, %v824
        %v858 = vmax.f32 %v826, 0.0
        %v859 = vmax.f32 %v827, 0.0
        %v860 = vmax.f32 %v828, 0.0
        %v861 = vmax.f32 %v829, 0.0
        %v862 = vmax.f32 %v830, 0.0
        %v863 = vmax.f32 %v831, 0.0
        %v864 = vmax.f32 %v832, 0.0
        %v865 = vmax.f32 %v833, 0.0
        %v866 = vmax.f32 %v834, 0.0
        %v867 = vmax.f32 %v835, 0.0
        %v868 = vmax.f32 %v836, 0.0
        %v869 = vmax.f32 %v837, 0.0
        %v870 = vmax.f32 %v838, 0.0
        %v871 = vmax.f32 %v839, 0.0
        %v872 = vmax.f32 %v840, 0.0
        %v873 = vmax.f32 %v841, 0.0
        %v874 = vmax.f32 %v842, 0.0
        %v875 = vmax.f32 %v843, 0.0
        %v876 = vmax.f32 %v844, 0.0
        %v877 = vmax.f32 %v845, 0.0
        %v878 = vmax.f32 %v846, 0.0
        %v879 = vmax.f32 %v847, 0.0
        %v880 = vmax.f32 %v848, 0.0
        %v881 = vmax.f32 %v849, 0.0
        %v882 = vmax.f32 %v850, 0.0
        %v883 = vmax.f32 %v851, 0.0
        %v884 = vmax.f32 %v852, 0.0
        %v885 = vmax.f32 %v853, 0.0
        %v886 = vmax.f32 %v854, 0.0
        %v887 = vmax.f32 %v855, 0.0
        %v888 = vmax.f32 %v856, 0.0
        %v889 = vmax.f32 %v857, 0.0
        %v890 = vpack.c.bf16 %v858, %v858
        %v891 = vpack.c.bf16 %v859, %v859
        %v892 = vpack.c.bf16 %v860, %v860
        %v893 = vpack.c.bf16 %v861, %v861
        %v894 = vpack.c.bf16 %v862, %v862
        %v895 = vpack.c.bf16 %v863, %v863
        %v896 = vpack.c.bf16 %v864, %v864
        %v897 = vpack.c.bf16 %v865, %v865
        %v898 = vpack.c.bf16 %v866, %v866
        %v899 = vpack.c.bf16 %v867, %v867
        %v900 = vpack.c.bf16 %v868, %v868
        %v901 = vpack.c.bf16 %v869, %v869
        %v902 = vpack.c.bf16 %v870, %v870
        %v903 = vpack.c.bf16 %v871, %v871
        %v904 = vpack.c.bf16 %v872, %v872
        %v905 = vpack.c.bf16 %v873, %v873
        %v906 = vpack.c.bf16 %v874, %v874
        %v907 = vpack.c.bf16 %v875, %v875
        %v908 = vpack.c.bf16 %v876, %v876
        %v909 = vpack.c.bf16 %v877, %v877
        %v910 = vpack.c.bf16 %v878, %v878
        %v911 = vpack.c.bf16 %v879, %v879
        %v912 = vpack.c.bf16 %v880, %v880
        %v913 = vpack.c.bf16 %v881, %v881
        %v914 = vpack.c.bf16 %v882, %v882
        %v915 = vpack.c.bf16 %v883, %v883
        %v916 = vpack.c.bf16 %v884, %v884
        %v917 = vpack.c.bf16 %v885, %v885
        %v918 = vpack.c.bf16 %v886, %v886
        %v919 = vpack.c.bf16 %v887, %v887
        %v920 = vpack.c.bf16 %v888, %v888
        %v921 = vpack.c.bf16 %v889, %v889
        %vm922 = vcmask 519168
        %923 = vst.msk [vmem:[%s286] sm:$0xf] %vm922, %v890
        %924 = vst.msk [vmem:[%s286 + $0x4] sm:$0xf] %vm922, %v891
        %925 = vst.msk [vmem:[%s286 + $0x8] sm:$0xf] %vm922, %v892
        %926 = vst.msk [vmem:[%s286 + $0xc] sm:$0xf] %vm922, %v893
        %927 = vst.msk [vmem:[%s286 + $0x10] sm:$0xf] %vm922, %v894
        %928 = vst.msk [vmem:[%s286 + $0x14] sm:$0xf] %vm922, %v895
        %929 = vst.msk [vmem:[%s286 + $0x18] sm:$0xf] %vm922, %v896
        %930 = vst.msk [vmem:[%s286 + $0x1c] sm:$0xf] %vm922, %v897
        %931 = vst.msk [vmem:[%s286 + $0x20] sm:$0xf] %vm922, %v898
        %932 = vst.msk [vmem:[%s286 + $0x24] sm:$0xf] %vm922, %v899
        %933 = vst.msk [vmem:[%s286 + $0x28] sm:$0xf] %vm922, %v900
        %934 = vst.msk [vmem:[%s286 + $0x2c] sm:$0xf] %vm922, %v901
        %935 = vst.msk [vmem:[%s286 + $0x30] sm:$0xf] %vm922, %v902
        %936 = vst.msk [vmem:[%s286 + $0x34] sm:$0xf] %vm922, %v903
        %937 = vst.msk [vmem:[%s286 + $0x38] sm:$0xf] %vm922, %v904
        %938 = vst.msk [vmem:[%s286 + $0x3c] sm:$0xf] %vm922, %v905
        %939 = vst.msk [vmem:[%s286 + $0x40] sm:$0xf] %vm922, %v906
        %940 = vst.msk [vmem:[%s286 + $0x44] sm:$0xf] %vm922, %v907
        %941 = vst.msk [vmem:[%s286 + $0x48] sm:$0xf] %vm922, %v908
        %942 = vst.msk [vmem:[%s286 + $0x4c] sm:$0xf] %vm922, %v909
        %943 = vst.msk [vmem:[%s286 + $0x50] sm:$0xf] %vm922, %v910
        %944 = vst.msk [vmem:[%s286 + $0x54] sm:$0xf] %vm922, %v911
        %945 = vst.msk [vmem:[%s286 + $0x58] sm:$0xf] %vm922, %v912
        %946 = vst.msk [vmem:[%s286 + $0x5c] sm:$0xf] %vm922, %v913
        %947 = vst.msk [vmem:[%s286 + $0x60] sm:$0xf] %vm922, %v914
        %948 = vst.msk [vmem:[%s286 + $0x64] sm:$0xf] %vm922, %v915
        %949 = vst.msk [vmem:[%s286 + $0x68] sm:$0xf] %vm922, %v916
        %950 = vst.msk [vmem:[%s286 + $0x6c] sm:$0xf] %vm922, %v917
        %951 = vst.msk [vmem:[%s286 + $0x70] sm:$0xf] %vm922, %v918
        %952 = vst.msk [vmem:[%s286 + $0x74] sm:$0xf] %vm922, %v919
        %953 = vst.msk [vmem:[%s286 + $0x78] sm:$0xf] %vm922, %v920
        %954 = vst.msk [vmem:[%s286 + $0x7c] sm:$0xf] %vm922, %v921
        %s955 = smul.u32 32, %s22
        %p956 = scmp.lt.s32.totalorder %s955, 255
        %s957 = scalar_select %p956, %s955, 255
        %p958 = scmp.lt.s32.totalorder %s23, 0
        %s959 = scalar_select %p958, %s23, 0
        %s960 = sadd.s32 %s959, %s957
        %s961 = smul.addr %s960, 4
        %s962 = scalar_lea.vmem %s4, %s961
        // Predicated region
        $region41: #{tpu_custom_call.1} parent=35 // pred_check
          %p963 = pneg %p154
        $region42: #{tpu_custom_call.1} parent=35 // pred_check_branch
          %965 = sbr.rel (%p963) target = $region44
        $region43: #{tpu_custom_call.1} parent=35 // pred_region
          %s966 = smul.u32 32, %s22
        $region44: #{tpu_custom_call.1} parent=35 // pred_fallthru
          _
      $region36: #{tpu_custom_call.1} parent=5 // pred_fallthru
        _
      %p967 = scmp.le.s32.totalorder 2, %s13
      // Predicated region
      $region45: #{tpu_custom_call.1} parent=5 // pred_check
        %p968 = pneg %p967
      $region46: #{tpu_custom_call.1} parent=5 // pred_check_branch
        %970 = sbr.rel (%p968) target = $region48
      $region47: #{tpu_custom_call.1} parent=5 // pred_region
        %s971 = ssub.s32 %s13, 2
        // Predicated region
        $region49: #{tpu_custom_call.1} parent=47 // pred_check
          %p972 = pneg %p160
        $region50: #{tpu_custom_call.1} parent=47 // pred_check_branch
          %974 = sbr.rel (%p972) target = $region52
        $region51: #{tpu_custom_call.1} parent=47 // pred_region
          %s975 = smul.u32 32, %s24
          %p976 = scmp.lt.s32.totalorder %s975, 255
          %s977 = scalar_select %p976, %s975, 255
          %p978 = scmp.lt.s32.totalorder %s25, 0
          %s979 = scalar_select %p978, %s25, 0
          %s980 = sadd.s32 %s979, %s977
          %s981 = smul.addr %s980, 4
          %s982 = scalar_lea.vmem %s4, %s981
        $region52: #{tpu_custom_call.1} parent=47 // pred_fallthru
          _
      $region48: #{tpu_custom_call.1} parent=5 // pred_fallthru
        _
    $region6: #{tpu_custom_call.1} parent=1 // loop_footer
      %s17 = sadd.s32 1, %s13
    $region7: #{tpu_custom_call.1} parent=1 // loop_footer_branch
      %12 = sbr.rel target = $region3
    $region8: #{tpu_custom_call.1} parent=1 // loop_exit
      _
    %983 = vsyncpa [#allocation3], 1
    %s984 = scalar_lea.sflag [#allocation3], 1
    %985 = vsyncpa %s984, 1

</llo_original>
